<compile_context>
chip_gen: v7x
topology: tpu7x:2x2x1
jax: 0.10.0
libtpu: 0.0.40
codegen_flags: <defaults>
</compile_context>

<pallas_src>
import numpy as np
import jax
import jax.numpy as jnp
from jax.experimental import pallas as pl
from jax.experimental.pallas import tpu as pltpu

LANES = 128          # vreg lane width
MIN_SUBLANES = 8     # f32 vreg sublane count


# ----------------------------- Pallas kernel --------------------------------

def _node_ce_acc_kernel(n_ref, l0_ref, l1_ref, assn_ref, out_ref):
    # n_ref   : (G,)       i32 SMEM (scalar prefetch) -- valid node count per slice
    # l0_ref  : (1,S,128)  f32 -- class-0 logits, nodes folded into sublanes+lanes
    # l1_ref  : (1,S,128)  f32 -- class-1 logits
    # assn_ref: (1,S,128)  f32 -- labels in {0.,1.}, padding = -1.
    # out_ref : (1,8,128)  f32 -- lane 0 = mean CE loss, lane 1 = accuracy
    g = pl.program_id(0)
    l0 = l0_ref[0]
    l1 = l1_ref[0]
    assn = assn_ref[0]

    mask = (assn >= 0.0).astype(jnp.float32)      # padding carries label -1
    is_one = assn > 0.5

    # 2-class CE in softplus form: loss = softplus(z_other - z_target).
    # Numerically stable; one exp + one log per node (single EUP port).
    d = jnp.where(is_one, l0 - l1, l1 - l0)
    per_loss = (jnp.maximum(d, 0.0) + jnp.log(1.0 + jnp.exp(-jnp.abs(d)))) * mask

    # argmax over 2 classes (ties -> class 0, matches torch/jnp first-max).
    correct = jnp.where((l1 > l0) == is_one, 1.0, 0.0) * mask

    # n is known on the host -> no cross-lane sum(mask), single scalar divide.
    inv_n = 1.0 / n_ref[g].astype(jnp.float32)
    loss = jnp.sum(per_loss) * inv_n              # CrossEntropyLoss(reduction='mean')
    acc = jnp.sum(correct) * inv_n                # accuracy

    lane = jax.lax.broadcasted_iota(jnp.int32, (MIN_SUBLANES, LANES), 1)
    out_ref[0] = jnp.where(lane == 0, loss, jnp.where(lane == 1, acc, 0.0))


@jax.jit
def _batched_node_loss_acc(counts, l0, l1, assn, inv_ngpus):
    """Single pallas_call over all gpu slices; returns (loss, acc) * inv_ngpus."""
    G, S, _ = l0.shape
    node_spec = pl.BlockSpec((1, S, LANES), lambda g, n: (g, 0, 0))
    out = pl.pallas_call(
        _node_ce_acc_kernel,
        out_shape=jax.ShapeDtypeStruct((G, MIN_SUBLANES, LANES), jnp.float32),
        grid_spec=pltpu.PrefetchScalarGridSpec(
            num_scalar_prefetch=1,
            grid=(G,),
            in_specs=[node_spec, node_spec, node_spec],
            out_specs=pl.BlockSpec((1, MIN_SUBLANES, LANES), lambda g, n: (g, 0, 0)),
        ),
        compiler_params=pltpu.CompilerParams(dimension_semantics=("parallel",)),
    )(counts, l0, l1, assn)
    loss = jnp.sum(out[:, 0, 0]) * inv_ngpus
    acc = jnp.sum(out[:, 0, 1]) * inv_ngpus
    return loss, acc


# ----------------------- numpy glue (label derivation) ----------------------

def reform_clusters(cluster_label, clust_ids, batch_ids):
    return [np.where((cluster_label[:, 5] == c) & (cluster_label[:, 3] == b))[0]
            for c, b in zip(clust_ids, batch_ids)]


def get_cluster_group(cluster_label, clusts):
    # group id (column 6) of each cluster (voxels of a cluster share group id)
    return np.array([cluster_label[c, 6][0] if len(c) else -1 for c in clusts])


def get_cluster_primary(clust_ids, group_ids):
    # a cluster is primary if its cluster id equals its group id
    return np.where(np.asarray(clust_ids) == np.asarray(group_ids))[0]


# ------------------------------ module port ---------------------------------

class NodeChannelLoss:
    def __init__(self, cfg):
        mc = cfg['modules']['node_model'] if 'modules' in cfg else cfg
        self.loss = mc.get('loss', 'CE')
        self.reduction = mc.get('reduction', 'mean')
        self.balance_classes = mc.get('balance_classes', False)
        self.target_photons = mc.get('target_photons', False)
        # TODO(synk): 'MM' (MultiMarginLoss), reduction='sum' and balance_classes
        # branches are not implemented in this synthetic kernel port.
        assert self.loss == 'CE' and self.reduction == 'mean' and not self.balance_classes

    def forward(self, out, clusters):
        ngpus = len(clusters)
        out['group_ids'] = []
        out['primary_ids'] = []

        valid = []   # (node_pred (C,2) f32, node_assn (C,) f32) per non-empty slice
        for i in range(len(clusters)):
            if not len(out['clust_ids'][i]):
                ngpus = max(1, ngpus - 1)
                continue
            cluster_label = np.asarray(clusters[i])
            clust_ids = np.asarray(out['clust_ids'][i])
            batch_ids = np.asarray(out['batch_ids'][i])
            clusts = reform_clusters(cluster_label, clust_ids, batch_ids)
            group_ids = get_cluster_group(cluster_label, clusts)
            primary_ids = get_cluster_primary(clust_ids, group_ids)
            out['group_ids'].append(group_ids)
            out['primary_ids'].append(primary_ids)

            node_assn = np.zeros(len(clust_ids), dtype=np.float32)
            node_assn[primary_ids] = 1.0
            node_pred = np.asarray(out['node_pred'][i], dtype=np.float32)
            valid.append((node_pred, node_assn))

        if not valid:
            return {'accuracy': 0.0, 'loss': 0.0}

        # ---- host-side padding: nodes folded into (S, 128) sublane x lane slabs ----
        G = len(valid)
        max_c = max(p.shape[0] for p, _ in valid)
        S = (max_c + LANES - 1) // LANES
        S = max(MIN_SUBLANES, ((S + MIN_SUBLANES - 1) // MIN_SUBLANES) * MIN_SUBLANES)

        l0 = np.zeros((G, S, LANES), np.float32)
        l1 = np.zeros((G, S, LANES), np.float32)
        assn = np.full((G, S, LANES), -1.0, np.float32)   # -1 marks padding
        counts = np.zeros((G,), np.int32)
        for g, (pred, lab) in enumerate(valid):
            c = pred.shape[0]
            l0[g].flat[:c] = pred[:, 0]
            l1[g].flat[:c] = pred[:, 1]
            assn[g].flat[:c] = lab
            counts[g] = c

        loss, acc = _batched_node_loss_acc(
            counts, l0, l1, assn, np.float32(1.0 / ngpus))
        return {'accuracy': acc, 'loss': loss}


# --------------------------------- demo --------------------------------------

if __name__ == "__main__":
    key = jax.random.PRNGKey(0)

    # Two "gpu" slices: C = 8 clusters each, spread across 2 batch entries,
    # 8 voxels per cluster -> cluster_label is (64, 8) per slice.
    ngpus = 2
    C = 8
    voxels_per_cluster = 8
    batch_ids = np.array([0, 0, 0, 0, 1, 1, 1, 1], dtype=np.int64)
    clust_ids = np.array([0, 1, 2, 3, 0, 1, 2, 3], dtype=np.int64)
    # group ids: primaries are clusters whose id == group id
    group_of_cluster_all = [
        np.array([0, 0, 2, 2, 1, 1, 2, 3], dtype=np.int64),
        np.array([0, 1, 0, 3, 0, 0, 2, 3], dtype=np.int64),
    ]

    clusters = []
    node_preds = []
    for s in range(ngpus):
        rows = []
        for ci in range(C):
            key, sub = jax.random.split(key)
            xyz = np.asarray(jax.random.uniform(sub, (voxels_per_cluster, 3))) * 16.0
            for v in range(voxels_per_cluster):
                rows.append([xyz[v, 0], xyz[v, 1], xyz[v, 2],
                             float(batch_ids[ci]), 1.0,
                             float(clust_ids[ci]),
                             float(group_of_cluster_all[s][ci]), 0.0])
        clusters.append(np.array(rows, dtype=np.float32))      # (64, 8)
        key, kpred = jax.random.split(key)
        node_preds.append(np.asarray(
            jax.random.normal(kpred, (C, 2), dtype=jnp.float32)))

    out = {
        'node_pred': node_preds,
        'clust_ids': [clust_ids, clust_ids],
        'batch_ids': [batch_ids, batch_ids],
        'edge_index': [np.zeros((2, 0), dtype=np.int64)] * ngpus,
    }

    cfg = {'modules': {'node_model': {'loss': 'CE', 'reduction': 'mean'}}}
    module = NodeChannelLoss(cfg)
    result = module.forward(out, clusters)
    jax.block_until_ready(result['loss'])
    jax.block_until_ready(result['accuracy'])

    # --- reference check (pure numpy, float64) ---
    ref_loss, ref_acc = 0.0, 0.0
    for s in range(ngpus):
        node_assn = (clust_ids == group_of_cluster_all[s]).astype(np.int64)
        logits = np.asarray(node_preds[s], dtype=np.float64)
        lse = np.logaddexp(logits[:, 0], logits[:, 1])
        ref_loss += np.mean(lse - logits[np.arange(C), node_assn])
        ref_acc += np.mean(np.argmax(logits, axis=1) == node_assn)
    ref_loss /= ngpus
    ref_acc /= ngpus
    assert abs(float(result['loss']) - ref_loss) < 1e-4, (float(result['loss']), ref_loss)
    assert abs(float(result['accuracy']) - ref_acc) < 1e-5, (float(result['accuracy']), ref_acc)

    print("KERNEL_OK")
</pallas_src>

<mosaic_0001>
module attributes {stable_mosaic.version = 11 : i64} {
  func.func @_node_ce_acc_kernel(%arg0: i32, %arg1: memref<2xi32, #tpu.memory_space<smem>>, %arg2: memref<1x8x128xf32, #tpu.memory_space<vmem>>, %arg3: memref<1x8x128xf32, #tpu.memory_space<vmem>>, %arg4: memref<1x8x128xf32, #tpu.memory_space<vmem>>, %arg5: memref<1x8x128xf32, #tpu.memory_space<vmem>>) attributes {dimension_semantics = [#tpu.dimension_semantics<parallel>], iteration_bounds = array<i64: 2>, scalar_prefetch = 1 : i64, scratch_operands = 0 : i64, tpu.core_type = #tpu.core_type<tc>, window_params = [{transform_indices = @transform_0, window_bounds = array<i64: 1, 8, 128>}, {transform_indices = @transform_1, window_bounds = array<i64: 1, 8, 128>}, {transform_indices = @transform_2, window_bounds = array<i64: 1, 8, 128>}, {transform_indices = @transform_3, window_bounds = array<i64: 1, 8, 128>}]} {
    %c0 = arith.constant 0 : index
    %c0_0 = arith.constant 0 : index
    %c0_1 = arith.constant 0 : index
    %0 = vector.load %arg2[%c0, %c0_0, %c0_1] : memref<1x8x128xf32, #tpu.memory_space<vmem>>, vector<1x8x128xf32>
    %1 = vector.shape_cast %0 : vector<1x8x128xf32> to vector<8x128xf32>
    %c0_2 = arith.constant 0 : index
    %c0_3 = arith.constant 0 : index
    %c0_4 = arith.constant 0 : index
    %2 = vector.load %arg3[%c0_2, %c0_3, %c0_4] : memref<1x8x128xf32, #tpu.memory_space<vmem>>, vector<1x8x128xf32>
    %3 = vector.shape_cast %2 : vector<1x8x128xf32> to vector<8x128xf32>
    %c0_5 = arith.constant 0 : index
    %c0_6 = arith.constant 0 : index
    %c0_7 = arith.constant 0 : index
    %4 = vector.load %arg4[%c0_5, %c0_6, %c0_7] : memref<1x8x128xf32, #tpu.memory_space<vmem>>, vector<1x8x128xf32>
    %5 = vector.shape_cast %4 : vector<1x8x128xf32> to vector<8x128xf32>
    %cst = arith.constant 0.000000e+00 : f32
    %6 = vector.broadcast %cst : f32 to vector<8x128xf32>
    %7 = arith.cmpf oge, %5, %6 : vector<8x128xf32>
    %8 = arith.extui %7 : vector<8x128xi1> to vector<8x128xi32>
    %9 = arith.sitofp %8 : vector<8x128xi32> to vector<8x128xf32>
    %cst_8 = arith.constant 5.000000e-01 : f32
    %10 = vector.broadcast %cst_8 : f32 to vector<8x128xf32>
    %11 = arith.cmpf ogt, %5, %10 : vector<8x128xf32>
    %12 = arith.subf %1, %3 : vector<8x128xf32>
    %13 = arith.subf %3, %1 : vector<8x128xf32>
    %14 = arith.select %11, %12, %13 : vector<8x128xi1>, vector<8x128xf32>
    %cst_9 = arith.constant 0.000000e+00 : f32
    %15 = vector.broadcast %cst_9 : f32 to vector<8x128xf32>
    %16 = arith.maximumf %14, %15 : vector<8x128xf32>
    %17 = math.absf %14 : vector<8x128xf32>
    %cst_10 = arith.constant 0.000000e+00 : f32
    %18 = vector.broadcast %cst_10 : f32 to vector<8x128xf32>
    %19 = arith.subf %18, %17 : vector<8x128xf32>
    %20 = math.exp %19 : vector<8x128xf32>
    %cst_11 = arith.constant 1.000000e+00 : f32
    %21 = vector.broadcast %cst_11 : f32 to vector<8x128xf32>
    %22 = arith.addf %21, %20 : vector<8x128xf32>
    %23 = math.log %22 : vector<8x128xf32>
    %24 = arith.addf %16, %23 : vector<8x128xf32>
    %25 = arith.mulf %24, %9 : vector<8x128xf32>
    %26 = arith.cmpf ogt, %3, %1 : vector<8x128xf32>
    %27 = arith.xori %26, %11 : vector<8x128xi1>
    %cst_12 = arith.constant dense<true> : vector<8x128xi1>
    %28 = arith.xori %27, %cst_12 : vector<8x128xi1>
    %cst_13 = arith.constant 1.000000e+00 : f32
    %cst_14 = arith.constant 0.000000e+00 : f32
    %29 = vector.broadcast %cst_13 : f32 to vector<8x128xf32>
    %30 = vector.broadcast %cst_14 : f32 to vector<8x128xf32>
    %31 = arith.select %28, %29, %30 : vector<8x128xi1>, vector<8x128xf32>
    %32 = arith.mulf %31, %9 : vector<8x128xf32>
    %33 = arith.index_cast %arg0 : i32 to index
    %34 = memref.load %arg1[%33] : memref<2xi32, #tpu.memory_space<smem>>
    %35 = arith.sitofp %34 : i32 to f32
    %cst_15 = arith.constant 1.000000e+00 : f32
    %36 = arith.divf %cst_15, %35 : f32
    %37 = vector.shape_cast %25 : vector<8x128xf32> to vector<1x8x128xf32>
    %cst_16 = arith.constant dense<0.000000e+00> : vector<1xf32>
    %38 = vector.multi_reduction <add>, %37, %cst_16 [1, 2] : vector<1x8x128xf32> to vector<1xf32>
    %39 = vector.shape_cast %38 : vector<1xf32> to vector<1x1x1xf32>
    %40 = vector.extract %39[0, 0, 0] : f32 from vector<1x1x1xf32>
    %41 = arith.mulf %40, %36 : f32
    %42 = vector.shape_cast %32 : vector<8x128xf32> to vector<1x8x128xf32>
    %cst_17 = arith.constant dense<0.000000e+00> : vector<1xf32>
    %43 = vector.multi_reduction <add>, %42, %cst_17 [1, 2] : vector<1x8x128xf32> to vector<1xf32>
    %44 = vector.shape_cast %43 : vector<1xf32> to vector<1x1x1xf32>
    %45 = vector.extract %44[0, 0, 0] : f32 from vector<1x1x1xf32>
    %46 = arith.mulf %45, %36 : f32
    %47 = tpu.iota {dimensions = array<i32: 1>} : vector<8x128xi32>
    %c0_i32 = arith.constant 0 : i32
    %48 = vector.broadcast %c0_i32 : i32 to vector<8x128xi32>
    %49 = arith.cmpi eq, %47, %48 : vector<8x128xi32>
    %c1_i32 = arith.constant 1 : i32
    %50 = vector.broadcast %c1_i32 : i32 to vector<8x128xi32>
    %51 = arith.cmpi eq, %47, %50 : vector<8x128xi32>
    %cst_18 = arith.constant 0.000000e+00 : f32
    %52 = vector.broadcast %46 : f32 to vector<8x128xf32>
    %53 = vector.broadcast %cst_18 : f32 to vector<8x128xf32>
    %54 = arith.select %51, %52, %53 : vector<8x128xi1>, vector<8x128xf32>
    %55 = vector.broadcast %41 : f32 to vector<8x128xf32>
    %56 = arith.select %49, %55, %54 : vector<8x128xi1>, vector<8x128xf32>
    %c0_19 = arith.constant 0 : index
    %c0_20 = arith.constant 0 : index
    %c0_21 = arith.constant 0 : index
    %57 = vector.load %arg5[%c0_19, %c0_20, %c0_21] : memref<1x8x128xf32, #tpu.memory_space<vmem>>, vector<1x8x128xf32>
    %58 = vector.shape_cast %57 : vector<1x8x128xf32> to vector<8x128xf32>
    %59 = vector.shape_cast %56 : vector<8x128xf32> to vector<1x8x128xf32>
    tpu.vector_store %arg5[%c0_19, %c0_20, %c0_21], %59 {strides = array<i32>} : memref<1x8x128xf32, #tpu.memory_space<vmem>>, vector<1x8x128xf32>,
    return
  }
  func.func @transform_0(%arg0: i32, %arg1: memref<2xi32, #tpu.memory_space<smem>>) -> (i32, i32, i32) {
    %c0_i32 = arith.constant 0 : i32
    %c0_i32_0 = arith.constant 0 : i32
    %c0_i32_1 = arith.constant 0 : i32
    return %arg0, %c0_i32, %c0_i32_0 : i32, i32, i32
  }
  func.func @transform_1(%arg0: i32, %arg1: memref<2xi32, #tpu.memory_space<smem>>) -> (i32, i32, i32) {
    %c0_i32 = arith.constant 0 : i32
    %c0_i32_0 = arith.constant 0 : i32
    %c0_i32_1 = arith.constant 0 : i32
    return %arg0, %c0_i32, %c0_i32_0 : i32, i32, i32
  }
  func.func @transform_2(%arg0: i32, %arg1: memref<2xi32, #tpu.memory_space<smem>>) -> (i32, i32, i32) {
    %c0_i32 = arith.constant 0 : i32
    %c0_i32_0 = arith.constant 0 : i32
    %c0_i32_1 = arith.constant 0 : i32
    return %arg0, %c0_i32, %c0_i32_0 : i32, i32, i32
  }
  func.func @transform_3(%arg0: i32, %arg1: memref<2xi32, #tpu.memory_space<smem>>) -> (i32, i32, i32) {
    %c0_i32 = arith.constant 0 : i32
    %c0_i32_0 = arith.constant 0 : i32
    %c0_i32_1 = arith.constant 0 : i32
    return %arg0, %c0_i32, %c0_i32_0 : i32, i32, i32
  }
}

</mosaic_0001>

<llo_original>
// kernel: _batched_node_loss_acc.1
$region0: #{_batched_node_loss_acc.1}
  #allocation0 [shape = 'u32[]', space=smem, size = 0x4, offset = 0x4, fixed_abs, tag = 'smem constant byte address 0x4 - core index']
  #allocation1 [shape = 'u32[144,128]{1,0:T(1,128)}', space=vmem, size = 0x12000, scoped, tag = 'internal scratch']
  #allocation2 [shape = 's32[1]{0}', space=sflag, size = 0x4, scoped, tag = 'scoped memory for _batched_node_loss_acc.1']
  #allocation3 [shape = 'u8[512]{0}', space=smem, size = 0x200, scoped, tag = 'prefetched SMEM operand 0']
  %s0 = inlined_call_operand.vmem [shape: s32[2], index: 0, kind: input, shape index: {}]
  %s1 = inlined_call_operand.hbm [shape: f32[2,8,128], index: 1, kind: input, shape index: {}]
  %s2 = inlined_call_operand.hbm [shape: f32[2,8,128], index: 2, kind: input, shape index: {}]
  %s3 = inlined_call_operand.hbm [shape: f32[2,8,128], index: 3, kind: input, shape index: {}]
  %s4 = inlined_call_operand.vmem [shape: f32[2,8,128], index: 4, kind: output, shape index: {}]
  %s5 = sld [smem:[#allocation0]]
  $region57: #{_batched_node_loss_acc.1} parent=0
    _
  %s7 = ssub.s32 1, %s5
  %s8 = scalar_select 0, %s7, %s5
  %s9 = sshll.u32 %s0, 4
  %s10 = int_to_ptr.vmem [resolvable:$true] %s9
  %12 = dma.vmem_to_smem %s10, 16, [#allocation3], [#allocation2]
  %13 = dma.done [#allocation2], 16
  %14 = sfence
  $region1: #{_batched_node_loss_acc.1} parent=0
    #allocation4 [shape = 'u8[8192]{0}', space=vmem, size = 0x2000, scoped, tag = 'input window, operand 1']
    #allocation5 [shape = 's32[2]{0}', space=sflag, size = 0x8, scoped, tag = 'scoped memory for _batched_node_loss_acc.1']
    #allocation6 [shape = 'u8[8192]{0}', space=vmem, size = 0x2000, scoped, tag = 'input window, operand 2']
    #allocation7 [shape = 's32[2]{0}', space=sflag, size = 0x8, scoped, tag = 'scoped memory for _batched_node_loss_acc.1']
    #allocation8 [shape = 'u8[8192]{0}', space=vmem, size = 0x2000, scoped, tag = 'input window, operand 3']
    %15 = vsyncpa [#allocation5], 0
    %s16 = scalar_lea.sflag [#allocation5], 1
    %17 = vsyncpa %s16, 0
    %18 = vsyncpa [#allocation7], 0
    %s19 = scalar_lea.sflag [#allocation7], 1
    %20 = vsyncpa %s19, 0
    loop: start=0, step=1, limit=4
    $region2: #{_batched_node_loss_acc.1} parent=1 // loop_pre_header
      _
    $region3: #{_batched_node_loss_acc.1} parent=1 // loop_header
      %s22 = sphi 0, %s26
      %p23 = scmp.ge.s32.totalorder %s22, 4
      %s32 = sphi 0, %s34
      %s35 = sphi 0, %s32
      %s36 = sphi 0, %s35
      %s52 = sphi 0, %s36
      %s58 = sphi 0, %s60
      %s61 = sphi 0, %s58
      %s62 = sphi 0, %s61
      %s78 = sphi 0, %s62
      %s84 = sphi 0, %s86
      %s87 = sphi 0, %s84
      %s88 = sphi 0, %s87
      %s104 = sphi 0, %s88
      %s110 = sphi 0, %s112
      %s113 = sphi 0, %s110
      %s114 = sphi 0, %s113
      %s130 = sphi 0, %s114
    $region4: #{_batched_node_loss_acc.1} parent=1 // loop_header_branch
      %25 = sbr.rel (%p23) target = $region8
    $region5: #{_batched_node_loss_acc.1} parent=1 // loop_body
      %s27 = ssub.s32 %s22, 1
      %s28 = ssub.s32 %s22, 2
      %s29 = sadd.s32 %s22, 1
      %s30 = ssub.s32 %s22, %s29
      %p31 = scmp.eq.s32.totalorder %s30, 0
      %s33 = sadd.s32 %s32, 1
      %s34 = scalar_select %p31, %s32, %s33
      %p37 = pneg %p31
      %p38 = scmp.eq.s32.totalorder %s22, 1
      %p39 = por %p37, %p38
      %p40 = scmp.ne.s32.totalorder %s32, %s35
      %p41 = scmp.eq.s32.totalorder %s22, 0
      %p42 = por %p40, %p41
      %p43 = scmp.ne.s32.totalorder %s32, %s35
      %p44 = scmp.eq.s32.totalorder %s27, 1
      %p45 = por %p43, %p44
      %p46 = scmp.ne.s32.totalorder %s35, %s36
      %p47 = scmp.eq.s32.totalorder %s27, 0
      %p48 = por %p46, %p47
      %p49 = scmp.ne.s32.totalorder %s35, %s36
      %p50 = scmp.eq.s32.totalorder %s28, 1
      %p51 = por %p49, %p50
      %p53 = scmp.ne.s32.totalorder %s36, %s52
      %p54 = scmp.eq.s32.totalorder %s28, 0
      %p55 = por %p53, %p54
      %s56 = ssub.s32 %s22, %s29
      %p57 = scmp.eq.s32.totalorder %s56, 0
      %s59 = sadd.s32 %s58, 1
      %s60 = scalar_select %p57, %s58, %s59
      %p63 = pneg %p57
      %p64 = scmp.eq.s32.totalorder %s22, 1
      %p65 = por %p63, %p64
      %p66 = scmp.ne.s32.totalorder %s58, %s61
      %p67 = scmp.eq.s32.totalorder %s22, 0
      %p68 = por %p66, %p67
      %p69 = scmp.ne.s32.totalorder %s58, %s61
      %p70 = scmp.eq.s32.totalorder %s27, 1
      %p71 = por %p69, %p70
      %p72 = scmp.ne.s32.totalorder %s61, %s62
      %p73 = scmp.eq.s32.totalorder %s27, 0
      %p74 = por %p72, %p73
      %p75 = scmp.ne.s32.totalorder %s61, %s62
      %p76 = scmp.eq.s32.totalorder %s28, 1
      %p77 = por %p75, %p76
      %p79 = scmp.ne.s32.totalorder %s62, %s78
      %p80 = scmp.eq.s32.totalorder %s28, 0
      %p81 = por %p79, %p80
      %s82 = ssub.s32 %s22, %s29
      %p83 = scmp.eq.s32.totalorder %s82, 0
      %s85 = sadd.s32 %s84, 1
      %s86 = scalar_select %p83, %s84, %s85
      %p89 = pneg %p83
      %p90 = scmp.eq.s32.totalorder %s22, 1
      %p91 = por %p89, %p90
      %p92 = scmp.ne.s32.totalorder %s84, %s87
      %p93 = scmp.eq.s32.totalorder %s22, 0
      %p94 = por %p92, %p93
      %p95 = scmp.ne.s32.totalorder %s84, %s87
      %p96 = scmp.eq.s32.totalorder %s27, 1
      %p97 = por %p95, %p96
      %p98 = scmp.ne.s32.totalorder %s87, %s88
      %p99 = scmp.eq.s32.totalorder %s27, 0
      %p100 = por %p98, %p99
      %p101 = scmp.ne.s32.totalorder %s87, %s88
      %p102 = scmp.eq.s32.totalorder %s28, 1
      %p103 = por %p101, %p102
      %p105 = scmp.ne.s32.totalorder %s88, %s104
      %p106 = scmp.eq.s32.totalorder %s28, 0
      %p107 = por %p105, %p106
      %s108 = ssub.s32 %s22, %s29
      %p109 = scmp.eq.s32.totalorder %s108, 0
      %s111 = sadd.s32 %s110, 1
      %s112 = scalar_select %p109, %s110, %s111
      %p115 = pneg %p109
      %p116 = scmp.eq.s32.totalorder %s22, 1
      %p117 = por %p115, %p116
      %p118 = scmp.ne.s32.totalorder %s110, %s113
      %p119 = scmp.eq.s32.totalorder %s22, 0
      %p120 = por %p118, %p119
      %p121 = scmp.ne.s32.totalorder %s110, %s113
      %p122 = scmp.eq.s32.totalorder %s27, 1
      %p123 = por %p121, %p122
      %p124 = scmp.ne.s32.totalorder %s113, %s114
      %p125 = scmp.eq.s32.totalorder %s27, 0
      %p126 = por %p124, %p125
      %p127 = scmp.ne.s32.totalorder %s113, %s114
      %p128 = scmp.eq.s32.totalorder %s28, 1
      %p129 = por %p127, %p128
      %p131 = scmp.ne.s32.totalorder %s114, %s130
      %p132 = scmp.eq.s32.totalorder %s28, 0
      %p133 = por %p131, %p132
      %p134 = scmp.le.s32.totalorder 1, %s22
      %p135 = scmp.lt.s32.totalorder %s22, 3
      %p136 = pnand %p134, %p135
      %p137 = pneg %p136
      // Predicated region
      $region9: #{_batched_node_loss_acc.1} parent=5 // pred_check
        _
      $region10: #{_batched_node_loss_acc.1} parent=5 // pred_check_branch
        %139 = sbr.rel (%p136) target = $region12
      $region11: #{_batched_node_loss_acc.1} parent=5 // pred_region
        %s140 = ssub.s32 %s22, 1
      $region12: #{_batched_node_loss_acc.1} parent=5 // pred_fallthru
        _
      %p141 = scmp.lt.s32.totalorder %s22, 2
      // Predicated region
      $region13: #{_batched_node_loss_acc.1} parent=5 // pred_check
        %p142 = pneg %p141
      $region14: #{_batched_node_loss_acc.1} parent=5 // pred_check_branch
        %144 = sbr.rel (%p142) target = $region16
      $region15: #{_batched_node_loss_acc.1} parent=5 // pred_region
        // Predicated region
        $region17: #{_batched_node_loss_acc.1} parent=15 // pred_check
          %p145 = pneg %p42
        $region18: #{_batched_node_loss_acc.1} parent=15 // pred_check_branch
          %147 = sbr.rel (%p145) target = $region20
        $region19: #{_batched_node_loss_acc.1} parent=15 // pred_region
          %s148 = sand.u32 %s32, 1
          %s149 = scalar_lea.sflag [#allocation5], %s148
          %s150 = sand.u32 %s32, 1
          %s151 = smul.addr %s150, 8
          %s152 = scalar_lea.vmem [#allocation4], %s151
          %s154 = ssub.s32 128, 128
          %155 = vsyncadd %s149, %s154
          %s156 = smul.addr %s22, 128
          %s157 = scalar_lea.hbm %s1, %s156
          %s159 = sshll.u32 %s152, 4
          %s160 = int_to_ptr.vmem [resolvable:$true] %s159
          %162 = dma.hbm_to_vmem [thread:$0]  %s157, 128, %s160, %s149
        $region20: #{_batched_node_loss_acc.1} parent=15 // pred_fallthru
          _
        // Predicated region
        $region21: #{_batched_node_loss_acc.1} parent=15 // pred_check
          %p163 = pneg %p68
        $region22: #{_batched_node_loss_acc.1} parent=15 // pred_check_branch
          %165 = sbr.rel (%p163) target = $region24
        $region23: #{_batched_node_loss_acc.1} parent=15 // pred_region
          %s166 = sand.u32 %s22, 1
          %s167 = scalar_lea.sflag [#allocation7], %s166
          %s168 = sand.u32 %s58, 1
          %s169 = smul.addr %s168, 8
          %s170 = scalar_lea.vmem [#allocation6], %s169
          %s172 = ssub.s32 128, 128
          %173 = vsyncadd %s167, %s172
          %s174 = smul.addr %s22, 128
          %s175 = scalar_lea.hbm %s2, %s174
          %s177 = sshll.u32 %s170, 4
          %s178 = int_to_ptr.vmem [resolvable:$true] %s177
          %180 = dma.hbm_to_vmem [thread:$0]  %s175, 128, %s178, %s167
        $region24: #{_batched_node_loss_acc.1} parent=15 // pred_fallthru
          _
        // Predicated region
        $region25: #{_batched_node_loss_acc.1} parent=15 // pred_check
          %p181 = pneg %p94
        $region26: #{_batched_node_loss_acc.1} parent=15 // pred_check_branch
          %183 = sbr.rel (%p181) target = $region28
        $region27: #{_batched_node_loss_acc.1} parent=15 // pred_region
          %s184 = sand.u32 %s22, 1
          %s185 = scalar_lea.sflag [#allocation7], %s184
          %s186 = sand.u32 %s84, 1
          %s187 = smul.addr %s186, 8
          %s188 = scalar_lea.vmem [#allocation8], %s187
          %s190 = ssub.s32 128, 128
          %191 = vsyncadd %s185, %s190
          %s192 = smul.addr %s22, 128
          %s193 = scalar_lea.hbm %s3, %s192
          %s195 = sshll.u32 %s188, 4
          %s196 = int_to_ptr.vmem [resolvable:$true] %s195
          %198 = dma.hbm_to_vmem [thread:$0]  %s193, 128, %s196, %s185
        $region28: #{_batched_node_loss_acc.1} parent=15 // pred_fallthru
          _
      $region16: #{_batched_node_loss_acc.1} parent=5 // pred_fallthru
        _
      %p199 = scmp.le.s32.totalorder 1, %s22
      %p200 = scmp.lt.s32.totalorder %s22, 3
      %p201 = pnand %p199, %p200
      %p202 = pneg %p201
      // Predicated region
      $region29: #{_batched_node_loss_acc.1} parent=5 // pred_check
        _
      $region30: #{_batched_node_loss_acc.1} parent=5 // pred_check_branch
        %204 = sbr.rel (%p201) target = $region32
      $region31: #{_batched_node_loss_acc.1} parent=5 // pred_region
        %s205 = ssub.s32 %s22, 1
        %s206 = sand.u32 %s35, 1
        %s207 = scalar_lea.sflag [#allocation5], %s206
        %s208 = sand.u32 %s35, 1
        %s209 = smul.addr %s208, 8
        %s210 = scalar_lea.vmem [#allocation4], %s209
        // Predicated region
        $region33: #{_batched_node_loss_acc.1} parent=31 // pred_check
          %p211 = pneg %p48
        $region34: #{_batched_node_loss_acc.1} parent=31 // pred_check_branch
          %213 = sbr.rel (%p211) target = $region36
        $region35: #{_batched_node_loss_acc.1} parent=31 // pred_region
          %214 = dma.done %s207, 128
        $region36: #{_batched_node_loss_acc.1} parent=31 // pred_fallthru
          _
        %s215 = sand.u32 %s27, 1
        %s216 = scalar_lea.sflag [#allocation7], %s215
        %s217 = sand.u32 %s61, 1
        %s218 = smul.addr %s217, 8
        %s219 = scalar_lea.vmem [#allocation6], %s218
        // Predicated region
        $region37: #{_batched_node_loss_acc.1} parent=31 // pred_check
          %p220 = pneg %p74
        $region38: #{_batched_node_loss_acc.1} parent=31 // pred_check_branch
          %222 = sbr.rel (%p220) target = $region40
        $region39: #{_batched_node_loss_acc.1} parent=31 // pred_region
          %223 = dma.done %s216, 128
        $region40: #{_batched_node_loss_acc.1} parent=31 // pred_fallthru
          _
        %s224 = sand.u32 %s27, 1
        %s225 = scalar_lea.sflag [#allocation7], %s224
        %s226 = sand.u32 %s87, 1
        %s227 = smul.addr %s226, 8
        %s228 = scalar_lea.vmem [#allocation8], %s227
        // Predicated region
        $region41: #{_batched_node_loss_acc.1} parent=31 // pred_check
          %p229 = pneg %p100
        $region42: #{_batched_node_loss_acc.1} parent=31 // pred_check_branch
          %231 = sbr.rel (%p229) target = $region44
        $region43: #{_batched_node_loss_acc.1} parent=31 // pred_region
          %232 = dma.done %s225, 128
        $region44: #{_batched_node_loss_acc.1} parent=31 // pred_fallthru
          _
        %s233 = sand.u32 %s35, 1
        %s234 = scalar_lea.sflag [#allocation5], %s233
        %s235 = sand.u32 %s35, 1
        %s236 = smul.addr %s235, 8
        %s237 = scalar_lea.vmem [#allocation4], %s236
        %p238 = pneg %p48
        %p239 = pneg %p45
        %s240 = sand.u32 %s27, 1
        %s241 = scalar_lea.sflag [#allocation7], %s240
        %s242 = sand.u32 %s61, 1
        %s243 = smul.addr %s242, 8
        %s244 = scalar_lea.vmem [#allocation6], %s243
        %p245 = pneg %p74
        %p246 = pneg %p71
        %s247 = sand.u32 %s27, 1
        %s248 = scalar_lea.sflag [#allocation7], %s247
        %s249 = sand.u32 %s87, 1
        %s250 = smul.addr %s249, 8
        %s251 = scalar_lea.vmem [#allocation8], %s250
        %p252 = pneg %p100
        %p253 = pneg %p97
        %p254 = pneg %p126
        %p255 = pneg %p123
        %p256 = scmp.lt.s32.totalorder %s27, 1
        %s257 = scalar_select %p256, %s27, 1
        %s258 = smul.addr %s257, 8
        %s259 = scalar_lea.vmem %s4, %s258
        %p260 = scmp.lt.s32.totalorder %s27, 1
        %s261 = scalar_select %p260, %s27, 1
        %s262 = smul.addr %s261, 8
        %s263 = scalar_lea.vmem %s4, %s262
        %v264 = vld [vmem:[%s210] sm:$0xff]
        %v265 = vld [vmem:[%s219] sm:$0xff]
        %v266 = vld [vmem:[%s228] sm:$0xff]
        %vm267 = vcmp.ge.f32.partialorder %v266, 0.0
        %v268 = vsel %vm267, 1, 0
        %v269 = vcvt.s32.f32 %v268
        %vm270 = vcmp.gt.f32.partialorder %v266, 0.5
        %v271 = vsub.f32 %v264, %v265
        %v272 = vsub.f32 %v265, %v264
        %v273 = vsel %vm270, %v271, %v272
        %v274 = vmax.f32 %v273, 0.0
        %v275 = vand.u32 2147483647, %v273
        %v276 = vsub.f32 0.0, %v275
        %v277 = vmul.f32 %v276, 1.442695
        %v278 = vpow.pop %v277
        %v279 = vadd.f32 %v278, 1.0
        %v280 = vlog2.pop %v279
        %v281 = vmul.f32 %v280, 0.6931472
        %v282 = vadd.f32 %v274, %v281
        %v283 = vmul.f32 %v282, %v269
        %vm284 = vcmp.gt.f32.partialorder %v265, %v264
        %vm285 = vmxor %vm284, %vm270
        %vm286 = vmxor %vm285, 1
        %v287 = vsel %vm286, 1.0, 0.0
        %v288 = vmul.f32 %v287, %v269
        %s289 = sld [smem:[#allocation3 + %s27]]
        %s290 = scvt.s32.f32 %s289
        %v291 = vstv %s290
        %v292 = vrcp.pop %v291
        %s293 = vtos %v292
        %294 = vadd.xlane.f32.xlu0 %v283
        %v295 = vpop.xlane.xlu0 %294
        %v296 = vrot.slane %v295, 4
        %v297 = vadd.f32 %v295, %v296
        %v298 = vrot.slane %v297, 2
        %v299 = vadd.f32 %v297, %v298
        %v300 = vrot.slane %v299, 1
        %v301 = vadd.f32 %v299, %v300
        %s302 = vtos %v301
        %s303 = smul.f32 %s302, %s293
        %304 = vadd.xlane.f32.xlu0 %v288
        %v305 = vpop.xlane.xlu0 %304
        %v306 = vrot.slane %v305, 4
        %v307 = vadd.f32 %v305, %v306
        %v308 = vrot.slane %v307, 2
        %v309 = vadd.f32 %v307, %v308
        %v310 = vrot.slane %v309, 1
        %v311 = vadd.f32 %v309, %v310
        %s312 = vtos %v311
        %s313 = smul.f32 %s312, %s293
        %v314 = vlaneseq
        %v315 = vand.u32 %v314, 127
        %vm316 = vcmp.eq.s32.totalorder %v315, 0
        %vm317 = vcmp.eq.s32.totalorder %v315, 1
        %v318 = vstv %s313
        %v319 = vsel %vm317, %v318, 0.0
        %v320 = vstv %s303
        %v321 = vsel %vm316, %v320, %v319
        %322 = vst [vmem:[%s263] sm:$0xff] %v321
        %p323 = scmp.lt.s32.totalorder %s27, 1
        %s324 = scalar_select %p323, %s27, 1
        %s325 = smul.addr %s324, 8
        %s326 = scalar_lea.vmem %s4, %s325
        // Predicated region
        $region45: #{_batched_node_loss_acc.1} parent=31 // pred_check
          %p327 = pneg %p123
        $region46: #{_batched_node_loss_acc.1} parent=31 // pred_check_branch
          %329 = sbr.rel (%p327) target = $region48
        $region47: #{_batched_node_loss_acc.1} parent=31 // pred_region
          _
        $region48: #{_batched_node_loss_acc.1} parent=31 // pred_fallthru
          _
      $region32: #{_batched_node_loss_acc.1} parent=5 // pred_fallthru
        _
      %p330 = scmp.le.s32.totalorder 2, %s22
      // Predicated region
      $region49: #{_batched_node_loss_acc.1} parent=5 // pred_check
        %p331 = pneg %p330
      $region50: #{_batched_node_loss_acc.1} parent=5 // pred_check_branch
        %333 = sbr.rel (%p331) target = $region52
      $region51: #{_batched_node_loss_acc.1} parent=5 // pred_region
        %s334 = ssub.s32 %s22, 2
        // Predicated region
        $region53: #{_batched_node_loss_acc.1} parent=51 // pred_check
          %p335 = pneg %p129
        $region54: #{_batched_node_loss_acc.1} parent=51 // pred_check_branch
          %337 = sbr.rel (%p335) target = $region56
        $region55: #{_batched_node_loss_acc.1} parent=51 // pred_region
          %p338 = scmp.lt.s32.totalorder %s28, 1
          %s339 = scalar_select %p338, %s28, 1
          %s340 = smul.addr %s339, 8
          %s341 = scalar_lea.vmem %s4, %s340
        $region56: #{_batched_node_loss_acc.1} parent=51 // pred_fallthru
          _
      $region52: #{_batched_node_loss_acc.1} parent=5 // pred_fallthru
        _
    $region6: #{_batched_node_loss_acc.1} parent=1 // loop_footer
      %s26 = sadd.s32 1, %s22
    $region7: #{_batched_node_loss_acc.1} parent=1 // loop_footer_branch
      %21 = sbr.rel target = $region3
    $region8: #{_batched_node_loss_acc.1} parent=1 // loop_exit
      _
    %342 = vsyncpa [#allocation5], 1
    %s343 = scalar_lea.sflag [#allocation5], 1
    %344 = vsyncpa %s343, 1
    %345 = vsyncpa [#allocation7], 1
    %s346 = scalar_lea.sflag [#allocation7], 1
    %347 = vsyncpa %s346, 1

</llo_original>
